<compile_context>
chip_gen: v7x
topology: tpu7x:2x2x1
jax: 0.10.0
libtpu: 0.0.40
codegen_flags: <defaults>
</compile_context>

<pallas_src>
import math

import jax
import jax.numpy as jnp
from jax.experimental import pallas as pl
from jax.experimental.pallas import tpu as pltpu


def _token_embedding_kernel(x_ref, w_ref, o_ref):
    # x_ref: (tile_s, K)     im2col block (K = 3*c_in + 1, last column is ones)
    # w_ref: (K, d_pad)      fused per-tap weights + bias row, lane-padded
    # o_ref: (tile_s, d_pad) output block
    o_ref[...] = jnp.dot(
        x_ref[...], w_ref[...], preferred_element_type=jnp.float32
    ).astype(o_ref.dtype)


def _round_up(n, m):
    return (n + m - 1) // m * m


def _choose_seq_tile(s_pad, per_row_bytes, batch, *, max_tile=2048,
                     vmem_budget=20 << 20):
    """Largest multiple of 8 dividing s_pad that fits the VMEM budget.

    When batch == 1 the tile is additionally capped at s_pad // 2 (if possible)
    so the grid has >= 2 steps and both v7x TensorCores get work.
    """
    cap = (vmem_budget // max(per_row_bytes, 1)) // 8 * 8
    cap = max(8, min(cap, max_tile, s_pad))
    if batch == 1 and s_pad >= 16:
        cap = min(cap, max(8, (s_pad // 2) // 8 * 8))
    t = cap
    while s_pad % t != 0:   # terminates: t == 8 always divides s_pad
        t -= 8
    return t


def token_embedding(x, weight, bias, *, max_tile=2048, vmem_budget=20 << 20):
    """Pallas equivalent of TokenEmbedding.forward(x).

    Args:
      x:      (B, S, c_in) input.
      weight: (d_model, c_in, 3) Conv1d weight (PyTorch layout).
      bias:   (d_model,) Conv1d bias.
    Returns:
      (B, S, d_model) array with x's dtype.
    """
    B, S, c_in = x.shape
    d_model = weight.shape[0]
    assert weight.shape == (d_model, c_in, 3)
    assert bias.shape == (d_model,)

    compute_dtype = x.dtype
    out_dtype = x.dtype
    K = 3 * c_in + 1

    # --- im2col over the circular kernel taps (one-time host-side glue). -----
    # tap k uses x[(t + k - 1) mod S]  ->  columns [k*c_in : (k+1)*c_in)
    x_prev = jnp.roll(x, shift=1, axis=1)    # x[(t-1) mod S]
    x_next = jnp.roll(x, shift=-1, axis=1)   # x[(t+1) mod S]
    ones = jnp.ones((B, S, 1), dtype=compute_dtype)
    x_cat = jnp.concatenate(
        [x_prev.astype(compute_dtype), x.astype(compute_dtype),
         x_next.astype(compute_dtype), ones], axis=-1)          # (B, S, K)

    # --- fused weight: [W0^T; W1^T; W2^T; bias] -> (K, d_model) --------------
    w_cat = jnp.concatenate(
        [jnp.transpose(weight, (2, 1, 0)).reshape(3 * c_in, d_model),
         bias.reshape(1, d_model)], axis=0).astype(compute_dtype)

    # Lane-dense output: pad d_model up to a multiple of 128 (sliced off later).
    d_pad = _round_up(d_model, 128)
    if d_pad != d_model:
        w_cat = jnp.pad(w_cat, ((0, 0), (0, d_pad - d_model)))

    # Sublane-aligned sequence: pad S up to a multiple of 8 (sliced off later).
    s_pad = _round_up(S, 8)
    if s_pad != S:
        x_cat = jnp.pad(x_cat, ((0, 0), (0, s_pad - S), (0, 0)))

    in_item = jnp.dtype(compute_dtype).itemsize
    out_item = jnp.dtype(out_dtype).itemsize
    # Per-row VMEM cost: double-buffered input + double-buffered output + f32 acc.
    per_row = 2 * K * in_item + 2 * d_pad * out_item + d_pad * 4
    tile_s = _choose_seq_tile(s_pad, per_row, B,
                              max_tile=max_tile, vmem_budget=vmem_budget)
    grid = (B, s_pad // tile_s)

    vmem_bytes = (2 * tile_s * K * in_item        # input block (double-buffered)
                  + 2 * K * d_pad * in_item       # weight block (double-buffered)
                  + 2 * tile_s * d_pad * out_item  # output block (double-buffered)
                  + tile_s * d_pad * 4)           # f32 matmul result
    vmem_limit = int(min(max(2 * vmem_bytes, 16 << 20), 64 << 20))

    cost = pl.CostEstimate(
        flops=2 * B * s_pad * K * d_pad,
        transcendentals=0,
        bytes_accessed=(B * s_pad * K * in_item          # im2col input
                        + K * d_pad * in_item            # weights (once)
                        + B * s_pad * d_pad * out_item),  # output (dominant)
    )

    out = pl.pallas_call(
        _token_embedding_kernel,
        out_shape=jax.ShapeDtypeStruct((B, s_pad, d_pad), out_dtype),
        grid_spec=pltpu.PrefetchScalarGridSpec(
            num_scalar_prefetch=0,
            grid=grid,
            in_specs=[
                # im2col block for this (batch, seq-tile) step.
                pl.BlockSpec((None, tile_s, K), lambda b, s: (b, s, 0)),
                # Fused weights + bias: tiny constant, fetched once.
                pl.BlockSpec((K, d_pad), lambda b, s: (0, 0)),
            ],
            out_specs=pl.BlockSpec((None, tile_s, d_pad), lambda b, s: (b, s, 0)),
        ),
        compiler_params=pltpu.CompilerParams(
            dimension_semantics=("parallel", "parallel"),
            vmem_limit_bytes=vmem_limit,
        ),
        cost_estimate=cost,
    )(x_cat, w_cat)

    return out[:, :S, :d_model]


def _reference_token_embedding(x, weight, bias):
    """Pure-JAX reference mirroring PyTorch Conv1d(k=3, padding=1, circular)."""
    B, S, c_in = x.shape
    d_model = weight.shape[0]
    x_pad = jnp.concatenate([x[:, S - 1:S, :], x, x[:, 0:1, :]], axis=1)
    out = jnp.broadcast_to(bias[None, None, :].astype(jnp.float32), (B, S, d_model))
    for k in range(3):
        out = out + jnp.einsum(
            "bsc,dc->bsd",
            x_pad[:, k:k + S, :].astype(jnp.float32),
            weight[:, :, k].astype(jnp.float32),
            precision=jax.lax.Precision.HIGHEST,
        )
    return out.astype(x.dtype)


if __name__ == "__main__":
    B, S, C_IN, D_MODEL = 2, 8, 4, 32

    key = jax.random.PRNGKey(0)
    k_x, k_w, k_b = jax.random.split(key, 3)
    x = jax.random.normal(k_x, (B, S, C_IN), dtype=jnp.float32)

    # Conv1d parameters in PyTorch layout. kaiming_normal_(fan_in, leaky_relu)
    # for the weight, default uniform for the bias (init is host-side glue).
    fan_in = C_IN * 3
    gain = math.sqrt(2.0 / (1.0 + 0.01 ** 2))
    weight = (gain / math.sqrt(fan_in)) * jax.random.normal(
        k_w, (D_MODEL, C_IN, 3), dtype=jnp.float32)
    bound = 1.0 / math.sqrt(fan_in)
    bias = jax.random.uniform(k_b, (D_MODEL,), minval=-bound, maxval=bound,
                              dtype=jnp.float32)

    out = jax.block_until_ready(token_embedding(x, weight, bias))
    ref = _reference_token_embedding(x, weight, bias)

    assert out.shape == (B, S, D_MODEL)
    assert out.dtype == x.dtype
    # Tolerance covers MXU-precision differences; structural errors are O(1).
    assert jnp.allclose(out, ref, atol=2e-3, rtol=2e-3)

    print("KERNEL_OK")
</pallas_src>

<mosaic_0001>
module attributes {stable_mosaic.version = 11 : i64} {
  func.func @_token_embedding_kernel(%arg0: i32, %arg1: i32, %arg2: memref<1x8x13xf32, #tpu.memory_space<vmem>>, %arg3: memref<13x128xf32, #tpu.memory_space<vmem>>, %arg4: memref<1x8x128xf32, #tpu.memory_space<vmem>>) attributes {dimension_semantics = [#tpu.dimension_semantics<parallel>, #tpu.dimension_semantics<parallel>], iteration_bounds = array<i64: 2, 1>, scalar_prefetch = 0 : i64, scratch_operands = 0 : i64, tpu.core_type = #tpu.core_type<tc>, window_params = [{transform_indices = @transform_0, window_bounds = array<i64: 1, 8, 13>}, {pipeline_mode = #tpu.pipeline_mode<synchronous>, transform_indices = @transform_1, window_bounds = array<i64: 13, 128>}, {transform_indices = @transform_2, window_bounds = array<i64: 1, 8, 128>}]} {
    %c0 = arith.constant 0 : index
    %c0_0 = arith.constant 0 : index
    %c0_1 = arith.constant 0 : index
    %0 = vector.load %arg2[%c0, %c0_0, %c0_1] : memref<1x8x13xf32, #tpu.memory_space<vmem>>, vector<1x8x13xf32>
    %1 = vector.shape_cast %0 : vector<1x8x13xf32> to vector<8x13xf32>
    %c0_2 = arith.constant 0 : index
    %c0_3 = arith.constant 0 : index
    %2 = vector.load %arg3[%c0_2, %c0_3] : memref<13x128xf32, #tpu.memory_space<vmem>>, vector<13x128xf32>
    %cst = arith.constant dense<0.000000e+00> : vector<8x128xf32>
    %3 = tpu.matmul %1, %2, %cst {dimension_numbers = #tpu.dot_dimension_numbers<[1], [0], [0], [1], [0, 0, 1, 1], [], []>} : vector<8x13xf32>, vector<13x128xf32>, vector<8x128xf32> -> vector<8x128xf32>
    %c0_4 = arith.constant 0 : index
    %c0_5 = arith.constant 0 : index
    %c0_6 = arith.constant 0 : index
    %4 = vector.load %arg4[%c0_4, %c0_5, %c0_6] : memref<1x8x128xf32, #tpu.memory_space<vmem>>, vector<1x8x128xf32>
    %5 = vector.shape_cast %4 : vector<1x8x128xf32> to vector<8x128xf32>
    %6 = vector.shape_cast %3 : vector<8x128xf32> to vector<1x8x128xf32>
    tpu.vector_store %arg4[%c0_4, %c0_5, %c0_6], %6 {strides = array<i32>} : memref<1x8x128xf32, #tpu.memory_space<vmem>>, vector<1x8x128xf32>,
    return
  }
  func.func @transform_0(%arg0: i32, %arg1: i32) -> (i32, i32, i32) {
    %c0_i32 = arith.constant 0 : i32
    %c0_i32_0 = arith.constant 0 : i32
    return %arg0, %arg1, %c0_i32 : i32, i32, i32
  }
  func.func @transform_1(%arg0: i32, %arg1: i32) -> (i32, i32) {
    %c0_i32 = arith.constant 0 : i32
    %c0_i32_0 = arith.constant 0 : i32
    %c0_i32_1 = arith.constant 0 : i32
    return %c0_i32, %c0_i32_0 : i32, i32
  }
  func.func @transform_2(%arg0: i32, %arg1: i32) -> (i32, i32, i32) {
    %c0_i32 = arith.constant 0 : i32
    %c0_i32_0 = arith.constant 0 : i32
    return %arg0, %arg1, %c0_i32 : i32, i32, i32
  }
}

</mosaic_0001>

<llo_original>
// kernel: tpu_custom_call.1
$region0: #{tpu_custom_call.1}
  #allocation0 [shape = 'u32[]', space=smem, size = 0x4, offset = 0x4, fixed_abs, tag = 'smem constant byte address 0x4 - core index']
  #allocation1 [shape = 'u32[144,128]{1,0:T(1,128)}', space=vmem, size = 0x12000, scoped, tag = 'internal scratch']
  %s0 = inlined_call_operand.hbm [shape: f32[2,8,13], index: 0, kind: input, shape index: {}]
  %s1 = inlined_call_operand.hbm [shape: f32[13,128], index: 1, kind: input, shape index: {}]
  %s2 = inlined_call_operand.hbm [shape: f32[2,8,128], index: 2, kind: output, shape index: {}]
  %s3 = sld [smem:[#allocation0]]
  $region49: #{tpu_custom_call.1} parent=0
    _
  %s5 = ssub.s32 1, %s3
  %s6 = scalar_select 0, %s5, %s3
  $region1: #{tpu_custom_call.1} parent=0
    #allocation2 [shape = 'u8[8192]{0}', space=vmem, size = 0x2000, scoped, tag = 'input window, operand 0']
    #allocation3 [shape = 's32[2]{0}', space=sflag, size = 0x8, scoped, tag = 'scoped memory for tpu_custom_call.1']
    #allocation4 [shape = 's32[2]{0}', space=sflag, size = 0x8, scoped, tag = 'scoped memory for tpu_custom_call.1']
    #allocation5 [shape = 'u8[8192]{0}', space=vmem, size = 0x2000, scoped, tag = 'input window, operand 1, single buffered']
    #allocation6 [shape = 's32[1]{0}', space=sflag, size = 0x4, scoped, tag = 'scoped memory for tpu_custom_call.1']
    #allocation7 [shape = 'u8[8192]{0}', space=vmem, size = 0x2000, scoped, tag = 'output window, operand 0']
    %7 = vsyncpa [#allocation3], 0
    %s8 = scalar_lea.sflag [#allocation3], 1
    %9 = vsyncpa %s8, 0
    %10 = vsyncpa [#allocation6], 0
    %11 = vsyncpa [#allocation4], 0
    %s12 = scalar_lea.sflag [#allocation4], 1
    %13 = vsyncpa %s12, 0
    loop: start=0, step=1, limit=4
    $region2: #{tpu_custom_call.1} parent=1 // loop_pre_header
      _
    $region3: #{tpu_custom_call.1} parent=1 // loop_header
      %s15 = sphi 0, %s19
      %p16 = scmp.ge.s32.totalorder %s15, 4
      %s22 = sphi 0, %s34
      %s23 = sphi 0, %s30
      %s24 = sphi 0, %s22
      %s25 = sphi 0, %s23
      %s26 = sphi 0, %s24
      %s27 = sphi 0, %s25
      %s39 = sphi 0, %s41
      %s42 = sphi 0, %s39
      %s43 = sphi 0, %s42
      %s59 = sphi 0, %s43
      %s63 = sphi 0, %s63
      %s65 = sphi 0, %s63
      %s66 = sphi 0, %s65
      %s80 = sphi 0, %s66
      %s88 = sphi 0, %s90
      %s91 = sphi 0, %s88
      %s92 = sphi 0, %s91
      %s108 = sphi 0, %s92
    $region4: #{tpu_custom_call.1} parent=1 // loop_header_branch
      %18 = sbr.rel (%p16) target = $region8
    $region5: #{tpu_custom_call.1} parent=1 // loop_body
      %s20 = ssub.s32 %s15, 1
      %s21 = ssub.s32 %s15, 2
      %s28 = sadd.s32 1, %s23
      %p29 = scmp.ge.s32.totalorder %s28, 1
      %s30 = scalar_select %p29, 0, %s28
      %s31 = sadd.s32 1, %s22
      %s32 = scalar_select %p29, %s31, %s22
      %p33 = scmp.ge.s32.totalorder %s32, 2
      %s34 = scalar_select %p33, 0, %s32
      %s35 = ssub.s32 %s22, %s34
      %s36 = ssub.s32 %s23, %s30
      %s37 = sor.u32 %s35, %s36
      %p38 = scmp.eq.s32.totalorder %s37, 0
      %s40 = sadd.s32 %s39, 1
      %s41 = scalar_select %p38, %s39, %s40
      %p44 = pneg %p38
      %p45 = scmp.eq.s32.totalorder %s15, 1
      %p46 = por %p44, %p45
      %p47 = scmp.ne.s32.totalorder %s39, %s42
      %p48 = scmp.eq.s32.totalorder %s15, 0
      %p49 = por %p47, %p48
      %p50 = scmp.ne.s32.totalorder %s39, %s42
      %p51 = scmp.eq.s32.totalorder %s20, 1
      %p52 = por %p50, %p51
      %p53 = scmp.ne.s32.totalorder %s42, %s43
      %p54 = scmp.eq.s32.totalorder %s20, 0
      %p55 = por %p53, %p54
      %p56 = scmp.ne.s32.totalorder %s42, %s43
      %p57 = scmp.eq.s32.totalorder %s21, 1
      %p58 = por %p56, %p57
      %p60 = scmp.ne.s32.totalorder %s43, %s59
      %p61 = scmp.eq.s32.totalorder %s21, 0
      %p62 = por %p60, %p61
      %s64 = sadd.s32 %s63, 1
      %p67 = scmp.eq.s32.totalorder %s15, 1
      %p68 = scmp.ne.s32.totalorder %s63, %s65
      %p69 = scmp.eq.s32.totalorder %s15, 0
      %p70 = por %p68, %p69
      %p71 = scmp.ne.s32.totalorder %s63, %s65
      %p72 = scmp.eq.s32.totalorder %s20, 1
      %p73 = por %p71, %p72
      %p74 = scmp.ne.s32.totalorder %s65, %s66
      %p75 = scmp.eq.s32.totalorder %s20, 0
      %p76 = por %p74, %p75
      %p77 = scmp.ne.s32.totalorder %s65, %s66
      %p78 = scmp.eq.s32.totalorder %s21, 1
      %p79 = por %p77, %p78
      %p81 = scmp.ne.s32.totalorder %s66, %s80
      %p82 = scmp.eq.s32.totalorder %s21, 0
      %p83 = por %p81, %p82
      %s84 = ssub.s32 %s22, %s34
      %s85 = ssub.s32 %s23, %s30
      %s86 = sor.u32 %s84, %s85
      %p87 = scmp.eq.s32.totalorder %s86, 0
      %s89 = sadd.s32 %s88, 1
      %s90 = scalar_select %p87, %s88, %s89
      %p93 = pneg %p87
      %p94 = scmp.eq.s32.totalorder %s15, 1
      %p95 = por %p93, %p94
      %p96 = scmp.ne.s32.totalorder %s88, %s91
      %p97 = scmp.eq.s32.totalorder %s15, 0
      %p98 = por %p96, %p97
      %p99 = scmp.ne.s32.totalorder %s88, %s91
      %p100 = scmp.eq.s32.totalorder %s20, 1
      %p101 = por %p99, %p100
      %p102 = scmp.ne.s32.totalorder %s91, %s92
      %p103 = scmp.eq.s32.totalorder %s20, 0
      %p104 = por %p102, %p103
      %p105 = scmp.ne.s32.totalorder %s91, %s92
      %p106 = scmp.eq.s32.totalorder %s21, 1
      %p107 = por %p105, %p106
      %p109 = scmp.ne.s32.totalorder %s92, %s108
      %p110 = scmp.eq.s32.totalorder %s21, 0
      %p111 = por %p109, %p110
      %p112 = scmp.le.s32.totalorder 1, %s15
      %p113 = scmp.lt.s32.totalorder %s15, 3
      %p114 = pnand %p112, %p113
      %p115 = pneg %p114
      // Predicated region
      $region9: #{tpu_custom_call.1} parent=5 // pred_check
        _
      $region10: #{tpu_custom_call.1} parent=5 // pred_check_branch
        %117 = sbr.rel (%p114) target = $region12
      $region11: #{tpu_custom_call.1} parent=5 // pred_region
        %s118 = ssub.s32 %s15, 1
        // Predicated region
        $region13: #{tpu_custom_call.1} parent=11 // pred_check
          %p119 = pneg %p76
        $region14: #{tpu_custom_call.1} parent=11 // pred_check_branch
          %121 = sbr.rel (%p119) target = $region16
        $region15: #{tpu_custom_call.1} parent=11 // pred_region
          %s123 = ssub.s32 256, 256
          %124 = vsyncadd [#allocation6], %s123
          %s125 = sshll.u32 [#allocation5], 4
          %s126 = int_to_ptr.vmem [resolvable:$true] %s125
          %131 = dma.hbm_to_vmem [thread:$0]  %s1, 256, %s126, [#allocation6], 128, 128, 8
        $region16: #{tpu_custom_call.1} parent=11 // pred_fallthru
          _
      $region12: #{tpu_custom_call.1} parent=5 // pred_fallthru
        _
      %p132 = scmp.lt.s32.totalorder %s15, 2
      // Predicated region
      $region17: #{tpu_custom_call.1} parent=5 // pred_check
        %p133 = pneg %p132
      $region18: #{tpu_custom_call.1} parent=5 // pred_check_branch
        %135 = sbr.rel (%p133) target = $region20
      $region19: #{tpu_custom_call.1} parent=5 // pred_region
        // Predicated region
        $region21: #{tpu_custom_call.1} parent=19 // pred_check
          %p136 = pneg %p49
        $region22: #{tpu_custom_call.1} parent=19 // pred_check_branch
          %138 = sbr.rel (%p136) target = $region24
        $region23: #{tpu_custom_call.1} parent=19 // pred_region
          %s139 = sand.u32 %s39, 1
          %s140 = scalar_lea.sflag [#allocation3], %s139
          %s141 = sand.u32 %s39, 1
          %s142 = smul.addr %s141, 8
          %s143 = scalar_lea.vmem [#allocation2], %s142
          %s145 = ssub.s32 128, 128
          %146 = vsyncadd %s140, %s145
          %s147 = sadd.s32 %s23, %s22
          %s148 = smul.addr %s147, 128
          %s149 = scalar_lea.hbm %s0, %s148
          %s151 = sshll.u32 %s143, 4
          %s152 = int_to_ptr.vmem [resolvable:$true] %s151
          %154 = dma.hbm_to_vmem [thread:$0]  %s149, 128, %s152, %s140
        $region24: #{tpu_custom_call.1} parent=19 // pred_fallthru
          _
      $region20: #{tpu_custom_call.1} parent=5 // pred_fallthru
        _
      %p155 = scmp.le.s32.totalorder 1, %s15
      %p156 = scmp.lt.s32.totalorder %s15, 3
      %p157 = pnand %p155, %p156
      %p158 = pneg %p157
      // Predicated region
      $region25: #{tpu_custom_call.1} parent=5 // pred_check
        _
      $region26: #{tpu_custom_call.1} parent=5 // pred_check_branch
        %160 = sbr.rel (%p157) target = $region28
      $region27: #{tpu_custom_call.1} parent=5 // pred_region
        %s161 = ssub.s32 %s15, 1
        %s162 = sand.u32 %s42, 1
        %s163 = scalar_lea.sflag [#allocation3], %s162
        %s164 = sand.u32 %s42, 1
        %s165 = smul.addr %s164, 8
        %s166 = scalar_lea.vmem [#allocation2], %s165
        // Predicated region
        $region29: #{tpu_custom_call.1} parent=27 // pred_check
          %p167 = pneg %p55
        $region30: #{tpu_custom_call.1} parent=27 // pred_check_branch
          %169 = sbr.rel (%p167) target = $region32
        $region31: #{tpu_custom_call.1} parent=27 // pred_region
          %170 = dma.done %s163, 128
        $region32: #{tpu_custom_call.1} parent=27 // pred_fallthru
          _
        // Predicated region
        $region33: #{tpu_custom_call.1} parent=27 // pred_check
          %p171 = pneg %p76
        $region34: #{tpu_custom_call.1} parent=27 // pred_check_branch
          %173 = sbr.rel (%p171) target = $region36
        $region35: #{tpu_custom_call.1} parent=27 // pred_region
          %174 = dma.done [#allocation6], 256
        $region36: #{tpu_custom_call.1} parent=27 // pred_fallthru
          _
        %s175 = sand.u32 %s42, 1
        %s176 = scalar_lea.sflag [#allocation3], %s175
        %s177 = sand.u32 %s42, 1
        %s178 = smul.addr %s177, 8
        %s179 = scalar_lea.vmem [#allocation2], %s178
        %p180 = pneg %p55
        %p181 = pneg %p52
        %p182 = pneg %p76
        %p183 = pneg %p73
        %p184 = pneg %p104
        %p185 = pneg %p101
        %s186 = sand.u32 %s91, 1
        %s187 = scalar_lea.sflag [#allocation4], %s186
        %s188 = sand.u32 %s91, 1
        %s189 = smul.addr %s188, 8
        %s190 = scalar_lea.vmem [#allocation7], %s189
        %v191 = vld [vmem:[%s166] sm:$0xff]
        %v192 = vld [vmem:[#allocation5] sm:$0xff]
        %v193 = vld [vmem:[#allocation5 + $0x8] sm:$0x1f]
        %vm194 = vcmask 105472
        %v196 = vsel %vm194, %v191, 0
        %vm198 = vcmask 1044480
        %v200 = vsel %vm198, %v193, 0
        %202 = vmatprep.subr.mxu0 0.0
        %203 = vmatpush1.msra.mxu0 %v192
        %204 = vmatprep.subr.mxu0 0.0
        %205 = vmatpush1.msra.mxu0 %v200
        %206 = vmatprep.subr.mxu0 0.0
        %207 = vmatpush1.msra.mxu0 0.0
        %208 = vmatprep.subr.mxu0 0.0
        %209 = vmatpush1.msra.mxu0 0.0
        %210 = vmatprep.subr.mxu0 0.0
        %211 = vmatpush1.msra.mxu0 0.0
        %212 = vmatprep.subr.mxu0 0.0
        %213 = vmatpush1.msra.mxu0 0.0
        %214 = vmatprep.subr.mxu0 0.0
        %215 = vmatpush1.msra.mxu0 0.0
        %216 = vmatprep.subr.mxu0 0.0
        %217 = vmatpush1.msra.mxu0 0.0
        %218 = vmatprep.subr.mxu0 0.0
        %219 = vmatpush1.msra.mxu0 0.0
        %220 = vmatprep.subr.mxu0 0.0
        %221 = vmatpush1.msra.mxu0 0.0
        %222 = vmatprep.subr.mxu0 0.0
        %223 = vmatpush1.msra.mxu0 0.0
        %224 = vmatprep.subr.mxu0 0.0
        %225 = vmatpush1.msra.mxu0 0.0
        %226 = vmatprep.subr.mxu0 0.0
        %227 = vmatpush1.msra.mxu0 0.0
        %228 = vmatprep.subr.mxu0 0.0
        %229 = vmatpush1.msra.mxu0 0.0
        %230 = vmatprep.subr.mxu0 0.0
        %231 = vmatpush1.msra.mxu0 0.0
        %232 = vmatprep.subr.mxu0 0.0
        %233 = vmatpush1.msra.mxu0 0.0
        %234 = vmatprep.subr.mxu0 0.0
        %235 = vmatpush1.msra.mxu0 0.0
        %236 = vmatprep.subr.mxu0 0.0
        %237 = vmatpush1.msra.mxu0 0.0
        %238 = vmatprep.subr.mxu0 0.0
        %239 = vmatpush1.msra.mxu0 0.0
        %240 = vmatprep.subr.mxu0 0.0
        %241 = vmatpush1.msra.mxu0 0.0
        %242 = vmatprep.subr.mxu0 0.0
        %243 = vmatpush1.msra.mxu0 0.0
        %244 = vmatprep.subr.mxu0 0.0
        %245 = vmatpush1.msra.mxu0 0.0
        %246 = vmatprep.subr.mxu0 0.0
        %247 = vmatpush1.msra.mxu0 0.0
        %248 = vmatprep.subr.mxu0 0.0
        %249 = vmatpush1.msra.mxu0 0.0
        %250 = vmatprep.subr.mxu0 0.0
        %251 = vmatpush1.msra.mxu0 0.0
        %252 = vmatprep.subr.mxu0 0.0
        %253 = vmatpush1.msra.mxu0 0.0
        %254 = vmatprep.subr.mxu0 0.0
        %255 = vmatpush1.msra.mxu0 0.0
        %256 = vmatprep.subr.mxu0 0.0
        %257 = vmatpush1.msra.mxu0 0.0
        %258 = vmatprep.subr.mxu0 0.0
        %259 = vmatpush1.msra.mxu0 0.0
        %260 = vmatprep.subr.mxu0 0.0
        %261 = vmatpush1.msra.mxu0 0.0
        %262 = vmatprep.subr.mxu0 0.0
        %263 = vmatpush1.msra.mxu0 0.0
        %264 = vmatprep.subr.mxu0 0.0
        %265 = vmatpush1.msra.mxu0 0.0
        %266 = vmatprep.mubr.f32.mxu0 0.0
        %267 = vmatmul.mubr.f32.gmra.mrb[0].mxu0 %v196
        %v268 = vpop.f32.mrb[0].mxu0
        %v269 = vadd.f32 0.0, %v268
        %v270 = vpop.f32.mrb[0].mxu0
        %271 = vdwg.mxu0
        %272 = vst [vmem:[%s190] sm:$0xff] %v269
        %s273 = sand.u32 %s91, 1
        %s274 = scalar_lea.sflag [#allocation4], %s273
        %s275 = sand.u32 %s91, 1
        %s276 = smul.addr %s275, 8
        %s277 = scalar_lea.vmem [#allocation7], %s276
        // Predicated region
        $region37: #{tpu_custom_call.1} parent=27 // pred_check
          %p278 = pneg %p101
        $region38: #{tpu_custom_call.1} parent=27 // pred_check_branch
          %280 = sbr.rel (%p278) target = $region40
        $region39: #{tpu_custom_call.1} parent=27 // pred_region
          %s282 = ssub.s32 128, 128
          %283 = vsyncadd %s274, %s282
          %s284 = sadd.s32 %s25, %s24
          %s285 = smul.addr %s284, 128
          %s286 = scalar_lea.hbm %s2, %s285
          %s288 = sshll.u32 %s277, 4
          %s289 = int_to_ptr.vmem [resolvable:$true] %s288
          %291 = dma.vmem_to_hbm [thread:$0]  %s289, 128, %s286, %s274
        $region40: #{tpu_custom_call.1} parent=27 // pred_fallthru
          _
      $region28: #{tpu_custom_call.1} parent=5 // pred_fallthru
        _
      %p292 = scmp.le.s32.totalorder 2, %s15
      // Predicated region
      $region41: #{tpu_custom_call.1} parent=5 // pred_check
        %p293 = pneg %p292
      $region42: #{tpu_custom_call.1} parent=5 // pred_check_branch
        %295 = sbr.rel (%p293) target = $region44
      $region43: #{tpu_custom_call.1} parent=5 // pred_region
        %s296 = ssub.s32 %s15, 2
        // Predicated region
        $region45: #{tpu_custom_call.1} parent=43 // pred_check
          %p297 = pneg %p107
        $region46: #{tpu_custom_call.1} parent=43 // pred_check_branch
          %299 = sbr.rel (%p297) target = $region48
        $region47: #{tpu_custom_call.1} parent=43 // pred_region
          %s300 = sand.u32 %s92, 1
          %s301 = scalar_lea.sflag [#allocation4], %s300
          %s302 = sand.u32 %s92, 1
          %s303 = smul.addr %s302, 8
          %s304 = scalar_lea.vmem [#allocation7], %s303
          %305 = dma.done %s301, 128
        $region48: #{tpu_custom_call.1} parent=43 // pred_fallthru
          _
      $region44: #{tpu_custom_call.1} parent=5 // pred_fallthru
        _
    $region6: #{tpu_custom_call.1} parent=1 // loop_footer
      %s19 = sadd.s32 1, %s15
    $region7: #{tpu_custom_call.1} parent=1 // loop_footer_branch
      %14 = sbr.rel target = $region3
    $region8: #{tpu_custom_call.1} parent=1 // loop_exit
      _
    %306 = vsyncpa [#allocation3], 1
    %s307 = scalar_lea.sflag [#allocation3], 1
    %308 = vsyncpa %s307, 1
    %309 = vsyncpa [#allocation6], 1
    %310 = vsyncpa [#allocation4], 1
    %s311 = scalar_lea.sflag [#allocation4], 1
    %312 = vsyncpa %s311, 1

</llo_original>
